<compile_context>
chip_gen: v6e
topology: v6e:2x2x1
jax: 0.10.0
libtpu: 0.0.40
codegen_flags: <defaults>
</compile_context>

<pallas_src>
import jax
import jax.numpy as jnp
from jax.experimental import pallas as pl
from jax.experimental.pallas import tpu as pltpu

LN_EPS = 1e-5


def _fused_encoder_kernel(x_ref, w1_ref, b1_ref, w2_ref, b2_ref,
                          gamma_ref, beta_ref, o_ref, act_ref):
    """One grid step = one (batch tile, layer) pair.

    grid = (batch_tiles, num_layers); the layer axis is innermost, so for a
    given batch tile the layers run sequentially while the activation stays
    resident in `act_ref` (f32 VMEM scratch).
    """
    layer = pl.program_id(1)

    # New batch tile: load the input activation once (x block index is
    # constant across the layer axis, so it is only DMA'd when `b` changes).
    @pl.when(layer == 0)
    def _():
        act_ref[...] = x_ref[...].astype(jnp.float32)

    x = act_ref[...]                                          # (TB, D) f32

    # linear1 + ReLU: bf16 MXU operands, f32 accumulation.
    h = jnp.dot(x.astype(jnp.bfloat16), w1_ref[0],
                preferred_element_type=jnp.float32)           # (TB, H)
    h = jnp.maximum(h + b1_ref[0], 0.0)

    # linear2
    y = jnp.dot(h.astype(jnp.bfloat16), w2_ref[0],
                preferred_element_type=jnp.float32)           # (TB, D)
    y = y + b2_ref[0]

    # dropout (inference => identity) + residual (Identity since in == out)
    y = y + x

    # LayerNorm over the feature dim, f32.
    mean = jnp.mean(y, axis=-1, keepdims=True)
    centered = y - mean
    var = jnp.mean(centered * centered, axis=-1, keepdims=True)
    out = centered * jax.lax.rsqrt(var + LN_EPS)
    out = out * gamma_ref[0] + beta_ref[0]

    # Carry activation to the next layer.
    act_ref[...] = out

    # Last layer: commit to the output block (written back to HBM when the
    # batch-tile index advances).
    @pl.when(layer == pl.num_programs(1) - 1)
    def _():
        o_ref[...] = out.astype(o_ref.dtype)


def dense_encoder(x, params, *, block_batch=256,
                  vmem_limit_bytes=48 * 1024 * 1024):
    """Fused DenseEncoder forward. x: (B, D); params: stacked per-layer arrays."""
    w1, b1, w2, b2, gamma, beta = params
    L, D, H = w1.shape
    B = x.shape[0]

    tb = min(block_batch, B)
    if tb != B:
        assert tb % 8 == 0, "batch tile must be a multiple of 8 (f32 sublanes)"
    assert B % tb == 0, "demo wrapper requires batch divisible by the batch tile"
    nb = B // tb

    def weight_spec(shape):
        # Per-layer parameter block; re-streamed (and pipelined) per layer.
        return pl.BlockSpec(shape, lambda b, l: (l, 0, 0))

    return pl.pallas_call(
        _fused_encoder_kernel,
        out_shape=jax.ShapeDtypeStruct((B, D), x.dtype),
        grid=(nb, L),
        in_specs=[
            pl.BlockSpec((tb, D), lambda b, l: (b, 0)),   # x (DMA once per batch tile)
            weight_spec((1, D, H)),                       # W1 (bf16)
            weight_spec((1, 1, H)),                       # b1
            weight_spec((1, H, D)),                       # W2 (bf16)
            weight_spec((1, 1, D)),                       # b2
            weight_spec((1, 1, D)),                       # gamma
            weight_spec((1, 1, D)),                       # beta
        ],
        out_specs=pl.BlockSpec((tb, D), lambda b, l: (b, 0)),
        scratch_shapes=[pltpu.VMEM((tb, D), jnp.float32)],   # resident activation
        compiler_params=pltpu.CompilerParams(
            dimension_semantics=("parallel", "arbitrary"),
            vmem_limit_bytes=vmem_limit_bytes,
        ),
    )(x, w1, b1, w2, b2, gamma, beta)


def init_params(key, num_layers, input_dim, hidden_dim,
                weight_dtype=jnp.bfloat16):
    """Stacked parameters. Linear weights stored (in, out) so kernel does x @ W."""
    D, H = input_dim, hidden_dim
    w1s, b1s, w2s, b2s = [], [], [], []
    for _ in range(num_layers):
        k1, k2, k3, k4, key = jax.random.split(key, 5)
        lim1 = 1.0 / (D ** 0.5)
        lim2 = 1.0 / (H ** 0.5)
        w1s.append(jax.random.uniform(k1, (D, H), jnp.float32, -lim1, lim1))
        b1s.append(jax.random.uniform(k2, (1, H), jnp.float32, -lim1, lim1))
        w2s.append(jax.random.uniform(k3, (H, D), jnp.float32, -lim2, lim2))
        b2s.append(jax.random.uniform(k4, (1, D), jnp.float32, -lim2, lim2))
    w1 = jnp.stack(w1s).astype(weight_dtype)          # (L, D, H)
    b1 = jnp.stack(b1s)                               # (L, 1, H) f32
    w2 = jnp.stack(w2s).astype(weight_dtype)          # (L, H, D)
    b2 = jnp.stack(b2s)                               # (L, 1, D) f32
    gamma = jnp.ones((num_layers, 1, D), jnp.float32)  # LayerNorm default init
    beta = jnp.zeros((num_layers, 1, D), jnp.float32)
    return (w1, b1, w2, b2, gamma, beta)


def dense_encoder_ref(x, params, *, matmul_dtype=jnp.bfloat16):
    """Pure-JAX reference (same dtypes as the kernel when matmul_dtype=bf16)."""
    w1, b1, w2, b2, gamma, beta = params
    L = w1.shape[0]
    x = x.astype(jnp.float32)
    for l in range(L):
        h = jnp.dot(x.astype(matmul_dtype), w1[l].astype(matmul_dtype),
                    preferred_element_type=jnp.float32)
        h = jnp.maximum(h + b1[l], 0.0)
        y = jnp.dot(h.astype(matmul_dtype), w2[l].astype(matmul_dtype),
                    preferred_element_type=jnp.float32)
        y = y + b2[l] + x
        mean = jnp.mean(y, axis=-1, keepdims=True)
        var = jnp.mean((y - mean) ** 2, axis=-1, keepdims=True)
        x = (y - mean) * jax.lax.rsqrt(var + LN_EPS) * gamma[l] + beta[l]
    return x


if __name__ == "__main__":
    # Small, lane-dense shapes: batch=128, input_dim=128,
    # hidden_dim=32 * expansion_factor=4 -> H=128, num_layers=3.
    batch, input_dim, hidden_dim, expansion, num_layers = 128, 128, 32, 4, 3
    H = hidden_dim * expansion

    key = jax.random.PRNGKey(0)
    kx, kp = jax.random.split(key)
    x = jax.random.normal(kx, (batch, input_dim), jnp.float32)
    params = init_params(kp, num_layers, input_dim, H)

    out = dense_encoder(x, params, block_batch=64)   # grid = (2 batch tiles, 3 layers)
    out = jax.block_until_ready(out)

    assert out.shape == (batch, input_dim)
    assert jnp.all(jnp.isfinite(out)), "non-finite output"

    # Primary check: same-dtype (bf16 matmul, f32 accumulate) reference.
    ref_bf16 = dense_encoder_ref(x, params, matmul_dtype=jnp.bfloat16)
    assert jnp.allclose(out, ref_bf16, atol=2e-3, rtol=2e-3), \
        "mismatch vs bf16-matmul reference"

    # Sanity check: full-f32 math reference (looser tolerance due to bf16 MXU feed).
    ref_f32 = dense_encoder_ref(x, params, matmul_dtype=jnp.float32)
    assert jnp.allclose(out, ref_f32, atol=1e-1, rtol=1e-1), \
        "mismatch vs f32 reference"

    print("KERNEL_OK")
</pallas_src>

<mosaic_0001>
module attributes {stable_mosaic.version = 11 : i64} {
  func.func @_fused_encoder_kernel(%arg0: i32, %arg1: i32, %arg2: memref<64x128xf32, #tpu.memory_space<vmem>>, %arg3: memref<1x128x128xbf16, #tpu.memory_space<vmem>>, %arg4: memref<1x1x128xf32, #tpu.memory_space<vmem>>, %arg5: memref<1x128x128xbf16, #tpu.memory_space<vmem>>, %arg6: memref<1x1x128xf32, #tpu.memory_space<vmem>>, %arg7: memref<1x1x128xf32, #tpu.memory_space<vmem>>, %arg8: memref<1x1x128xf32, #tpu.memory_space<vmem>>, %arg9: memref<64x128xf32, #tpu.memory_space<vmem>>, %arg10: memref<64x128xf32, #tpu.memory_space<vmem>>) attributes {dimension_semantics = [#tpu.dimension_semantics<parallel>, #tpu.dimension_semantics<arbitrary>], iteration_bounds = array<i64: 2, 3>, scalar_prefetch = 0 : i64, scratch_operands = 1 : i64, tpu.core_type = #tpu.core_type<tc>, window_params = [{transform_indices = @transform_0, window_bounds = array<i64: 64, 128>}, {transform_indices = @transform_1, window_bounds = array<i64: 1, 128, 128>}, {transform_indices = @transform_2, window_bounds = array<i64: 1, 1, 128>}, {transform_indices = @transform_3, window_bounds = array<i64: 1, 128, 128>}, {transform_indices = @transform_4, window_bounds = array<i64: 1, 1, 128>}, {transform_indices = @transform_5, window_bounds = array<i64: 1, 1, 128>}, {transform_indices = @transform_6, window_bounds = array<i64: 1, 1, 128>}, {transform_indices = @transform_7, window_bounds = array<i64: 64, 128>}]} {
    %c0_i32 = arith.constant 0 : i32
    %0 = arith.cmpi eq, %arg1, %c0_i32 : i32
    %1 = arith.extui %0 : i1 to i32
    %c0_i32_0 = arith.constant 0 : i32
    %2 = arith.cmpi ne, %1, %c0_i32_0 : i32
    scf.if %2 {
      %c0_30 = arith.constant 0 : index
      %c0_31 = arith.constant 0 : index
      %51 = vector.load %arg2[%c0_30, %c0_31] : memref<64x128xf32, #tpu.memory_space<vmem>>, vector<64x128xf32>
      %c0_32 = arith.constant 0 : index
      %c0_33 = arith.constant 0 : index
      %52 = vector.load %arg10[%c0_32, %c0_33] : memref<64x128xf32, #tpu.memory_space<vmem>>, vector<64x128xf32>
      tpu.vector_store %arg10[%c0_32, %c0_33], %51 {strides = array<i32>} : memref<64x128xf32, #tpu.memory_space<vmem>>, vector<64x128xf32>,
    } else {
    }
    %c0 = arith.constant 0 : index
    %c0_1 = arith.constant 0 : index
    %3 = vector.load %arg10[%c0, %c0_1] : memref<64x128xf32, #tpu.memory_space<vmem>>, vector<64x128xf32>
    %4 = arith.truncf %3 : vector<64x128xf32> to vector<64x128xbf16>
    %c0_2 = arith.constant 0 : index
    %c0_3 = arith.constant 0 : index
    %c0_4 = arith.constant 0 : index
    %5 = vector.load %arg3[%c0_2, %c0_3, %c0_4] : memref<1x128x128xbf16, #tpu.memory_space<vmem>>, vector<1x128x128xbf16>
    %6 = vector.shape_cast %5 : vector<1x128x128xbf16> to vector<128x128xbf16>
    %cst = arith.constant dense<0.000000e+00> : vector<64x128xf32>
    %7 = tpu.matmul %4, %6, %cst {dimension_numbers = #tpu.dot_dimension_numbers<[1], [0], [0], [1], [0, 0, 1, 1], [], []>} : vector<64x128xbf16>, vector<128x128xbf16>, vector<64x128xf32> -> vector<64x128xf32>
    %c0_5 = arith.constant 0 : index
    %c0_6 = arith.constant 0 : index
    %c0_7 = arith.constant 0 : index
    %8 = vector.load %arg4[%c0_5, %c0_6, %c0_7] : memref<1x1x128xf32, #tpu.memory_space<vmem>>, vector<1x1x128xf32>
    %9 = vector.shape_cast %8 : vector<1x1x128xf32> to vector<1x128xf32>
    %10 = vector.broadcast %9 : vector<1x128xf32> to vector<64x128xf32>
    %11 = arith.addf %7, %10 : vector<64x128xf32>
    %cst_8 = arith.constant 0.000000e+00 : f32
    %12 = vector.broadcast %cst_8 : f32 to vector<64x128xf32>
    %13 = arith.maximumf %11, %12 : vector<64x128xf32>
    %14 = arith.truncf %13 : vector<64x128xf32> to vector<64x128xbf16>
    %c0_9 = arith.constant 0 : index
    %c0_10 = arith.constant 0 : index
    %c0_11 = arith.constant 0 : index
    %15 = vector.load %arg5[%c0_9, %c0_10, %c0_11] : memref<1x128x128xbf16, #tpu.memory_space<vmem>>, vector<1x128x128xbf16>
    %16 = vector.shape_cast %15 : vector<1x128x128xbf16> to vector<128x128xbf16>
    %cst_12 = arith.constant dense<0.000000e+00> : vector<64x128xf32>
    %17 = tpu.matmul %14, %16, %cst_12 {dimension_numbers = #tpu.dot_dimension_numbers<[1], [0], [0], [1], [0, 0, 1, 1], [], []>} : vector<64x128xbf16>, vector<128x128xbf16>, vector<64x128xf32> -> vector<64x128xf32>
    %c0_13 = arith.constant 0 : index
    %c0_14 = arith.constant 0 : index
    %c0_15 = arith.constant 0 : index
    %18 = vector.load %arg6[%c0_13, %c0_14, %c0_15] : memref<1x1x128xf32, #tpu.memory_space<vmem>>, vector<1x1x128xf32>
    %19 = vector.shape_cast %18 : vector<1x1x128xf32> to vector<1x128xf32>
    %20 = vector.broadcast %19 : vector<1x128xf32> to vector<64x128xf32>
    %21 = arith.addf %17, %20 : vector<64x128xf32>
    %22 = arith.addf %21, %3 : vector<64x128xf32>
    %cst_16 = arith.constant dense<0.000000e+00> : vector<64xf32>
    %23 = vector.multi_reduction <add>, %22, %cst_16 [1] : vector<64x128xf32> to vector<64xf32>
    %24 = vector.shape_cast %23 : vector<64xf32> to vector<64x1xf32>
    %cst_17 = arith.constant 1.280000e+02 : f32
    %25 = vector.broadcast %cst_17 : f32 to vector<64x1xf32>
    %26 = arith.divf %24, %25 : vector<64x1xf32>
    %27 = vector.broadcast %26 : vector<64x1xf32> to vector<64x128xf32>
    %28 = arith.subf %22, %27 : vector<64x128xf32>
    %29 = arith.mulf %28, %28 : vector<64x128xf32>
    %cst_18 = arith.constant dense<0.000000e+00> : vector<64xf32>
    %30 = vector.multi_reduction <add>, %29, %cst_18 [1] : vector<64x128xf32> to vector<64xf32>
    %31 = vector.shape_cast %30 : vector<64xf32> to vector<64x1xf32>
    %cst_19 = arith.constant 1.280000e+02 : f32
    %32 = vector.broadcast %cst_19 : f32 to vector<64x1xf32>
    %33 = arith.divf %31, %32 : vector<64x1xf32>
    %cst_20 = arith.constant 9.99999974E-6 : f32
    %34 = vector.broadcast %cst_20 : f32 to vector<64x1xf32>
    %35 = arith.addf %33, %34 : vector<64x1xf32>
    %36 = math.rsqrt %35 : vector<64x1xf32>
    %37 = vector.broadcast %36 : vector<64x1xf32> to vector<64x128xf32>
    %38 = arith.mulf %28, %37 : vector<64x128xf32>
    %c0_21 = arith.constant 0 : index
    %c0_22 = arith.constant 0 : index
    %c0_23 = arith.constant 0 : index
    %39 = vector.load %arg7[%c0_21, %c0_22, %c0_23] : memref<1x1x128xf32, #tpu.memory_space<vmem>>, vector<1x1x128xf32>
    %40 = vector.shape_cast %39 : vector<1x1x128xf32> to vector<1x128xf32>
    %41 = vector.broadcast %40 : vector<1x128xf32> to vector<64x128xf32>
    %42 = arith.mulf %38, %41 : vector<64x128xf32>
    %c0_24 = arith.constant 0 : index
    %c0_25 = arith.constant 0 : index
    %c0_26 = arith.constant 0 : index
    %43 = vector.load %arg8[%c0_24, %c0_25, %c0_26] : memref<1x1x128xf32, #tpu.memory_space<vmem>>, vector<1x1x128xf32>
    %44 = vector.shape_cast %43 : vector<1x1x128xf32> to vector<1x128xf32>
    %45 = vector.broadcast %44 : vector<1x128xf32> to vector<64x128xf32>
    %46 = arith.addf %42, %45 : vector<64x128xf32>
    %c0_27 = arith.constant 0 : index
    %c0_28 = arith.constant 0 : index
    %47 = vector.load %arg10[%c0_27, %c0_28] : memref<64x128xf32, #tpu.memory_space<vmem>>, vector<64x128xf32>
    tpu.vector_store %arg10[%c0_27, %c0_28], %46 {strides = array<i32>} : memref<64x128xf32, #tpu.memory_space<vmem>>, vector<64x128xf32>,
    %c2_i32 = arith.constant 2 : i32
    %48 = arith.cmpi eq, %arg1, %c2_i32 : i32
    %49 = arith.extui %48 : i1 to i32
    %c0_i32_29 = arith.constant 0 : i32
    %50 = arith.cmpi ne, %49, %c0_i32_29 : i32
    scf.if %50 {
      %c0_30 = arith.constant 0 : index
      %c0_31 = arith.constant 0 : index
      %51 = vector.load %arg9[%c0_30, %c0_31] : memref<64x128xf32, #tpu.memory_space<vmem>>, vector<64x128xf32>
      tpu.vector_store %arg9[%c0_30, %c0_31], %46 {strides = array<i32>} : memref<64x128xf32, #tpu.memory_space<vmem>>, vector<64x128xf32>,
    } else {
    }
    return
  }
  func.func @transform_0(%arg0: i32, %arg1: i32) -> (i32, i32) {
    %c0_i32 = arith.constant 0 : i32
    %c0_i32_0 = arith.constant 0 : i32
    return %arg0, %c0_i32 : i32, i32
  }
  func.func @transform_1(%arg0: i32, %arg1: i32) -> (i32, i32, i32) {
    %c0_i32 = arith.constant 0 : i32
    %c0_i32_0 = arith.constant 0 : i32
    %c0_i32_1 = arith.constant 0 : i32
    return %arg1, %c0_i32, %c0_i32_0 : i32, i32, i32
  }
  func.func @transform_2(%arg0: i32, %arg1: i32) -> (i32, i32, i32) {
    %c0_i32 = arith.constant 0 : i32
    %c0_i32_0 = arith.constant 0 : i32
    %c0_i32_1 = arith.constant 0 : i32
    return %arg1, %c0_i32, %c0_i32_0 : i32, i32, i32
  }
  func.func @transform_3(%arg0: i32, %arg1: i32) -> (i32, i32, i32) {
    %c0_i32 = arith.constant 0 : i32
    %c0_i32_0 = arith.constant 0 : i32
    %c0_i32_1 = arith.constant 0 : i32
    return %arg1, %c0_i32, %c0_i32_0 : i32, i32, i32
  }
  func.func @transform_4(%arg0: i32, %arg1: i32) -> (i32, i32, i32) {
    %c0_i32 = arith.constant 0 : i32
    %c0_i32_0 = arith.constant 0 : i32
    %c0_i32_1 = arith.constant 0 : i32
    return %arg1, %c0_i32, %c0_i32_0 : i32, i32, i32
  }
  func.func @transform_5(%arg0: i32, %arg1: i32) -> (i32, i32, i32) {
    %c0_i32 = arith.constant 0 : i32
    %c0_i32_0 = arith.constant 0 : i32
    %c0_i32_1 = arith.constant 0 : i32
    return %arg1, %c0_i32, %c0_i32_0 : i32, i32, i32
  }
  func.func @transform_6(%arg0: i32, %arg1: i32) -> (i32, i32, i32) {
    %c0_i32 = arith.constant 0 : i32
    %c0_i32_0 = arith.constant 0 : i32
    %c0_i32_1 = arith.constant 0 : i32
    return %arg1, %c0_i32, %c0_i32_0 : i32, i32, i32
  }
  func.func @transform_7(%arg0: i32, %arg1: i32) -> (i32, i32) {
    %c0_i32 = arith.constant 0 : i32
    %c0_i32_0 = arith.constant 0 : i32
    return %arg0, %c0_i32 : i32, i32
  }
}

</mosaic_0001>

<llo_original>
// kernel: tpu_custom_call.1
$region0: #{tpu_custom_call.1}
  #allocation0 [shape = 'u32[]', space=smem, size = 0x4, offset = 0x4, fixed_abs, tag = 'smem constant byte address 0x4 - core index']
  #allocation1 [shape = 'u32[144,128]{1,0:T(1,128)}', space=vmem, size = 0x12000, scoped, tag = 'internal scratch']
  #allocation2 [shape = 'f32[64,128]{1,0:T(8,128)}', space=vmem, size = 0x8000, scoped, tag = 'scratch operand']
  %s0 = inlined_call_operand.hbm [shape: f32[128,128], index: 0, kind: input, shape index: {}]
  %s1 = inlined_call_operand.hbm [shape: bf16[3,128,128], index: 1, kind: input, shape index: {}]
  %s2 = inlined_call_operand.vmem [shape: f32[3,1,128], index: 2, kind: input, shape index: {}]
  %s3 = inlined_call_operand.hbm [shape: bf16[3,128,128], index: 3, kind: input, shape index: {}]
  %s4 = inlined_call_operand.vmem [shape: f32[3,1,128], index: 4, kind: input, shape index: {}]
  %s5 = inlined_call_operand.vmem [shape: f32[3,1,128], index: 5, kind: input, shape index: {}]
  %s6 = inlined_call_operand.hbm [shape: f32[3,1,128], index: 6, kind: input, shape index: {}]
  %s7 = inlined_call_operand.hbm [shape: f32[128,128], index: 7, kind: output, shape index: {}]
  %s8 = sld [smem:[#allocation0]]
  $region85: #{tpu_custom_call.1} parent=0
    _
  %s10 = ssub.s32 1, %s8
  %s11 = scalar_select 0, %s10, %s8
  $region1: #{tpu_custom_call.1} parent=0
    #allocation3 [shape = 'u8[65536]{0}', space=vmem, size = 0x10000, scoped, tag = 'input window, operand 0']
    #allocation4 [shape = 's32[2]{0}', space=sflag, size = 0x8, scoped, tag = 'scoped memory for tpu_custom_call.1']
    #allocation5 [shape = 's32[2]{0}', space=sflag, size = 0x8, scoped, tag = 'scoped memory for tpu_custom_call.1']
    #allocation6 [shape = 'u8[65536]{0}', space=vmem, size = 0x10000, scoped, tag = 'input window, operand 1']
    #allocation7 [shape = 's32[2]{0}', space=sflag, size = 0x8, scoped, tag = 'scoped memory for tpu_custom_call.1']
    #allocation8 [shape = 'u8[65536]{0}', space=vmem, size = 0x10000, scoped, tag = 'input window, operand 3']
    #allocation9 [shape = 'u8[1024]{0}', space=vmem, size = 0x400, scoped, tag = 'input window, operand 6']
    #allocation10 [shape = 's32[2]{0}', space=sflag, size = 0x8, scoped, tag = 'scoped memory for tpu_custom_call.1']
    #allocation11 [shape = 'u8[65536]{0}', space=vmem, size = 0x10000, scoped, tag = 'output window, operand 0']
    %12 = vsyncpa [#allocation4], 0
    %s13 = scalar_lea.sflag [#allocation4], 1
    %14 = vsyncpa %s13, 0
    %15 = vsyncpa [#allocation7], 0
    %s16 = scalar_lea.sflag [#allocation7], 1
    %17 = vsyncpa %s16, 0
    %18 = vsyncpa [#allocation10], 0
    %s19 = scalar_lea.sflag [#allocation10], 1
    %20 = vsyncpa %s19, 0
    %21 = vsyncpa [#allocation5], 0
    %s22 = scalar_lea.sflag [#allocation5], 1
    %23 = vsyncpa %s22, 0
    loop: start=0, step=1, limit=8
    $region2: #{tpu_custom_call.1} parent=1 // loop_pre_header
      _
    $region3: #{tpu_custom_call.1} parent=1 // loop_header
      %s25 = sphi 0, %s29
      %p26 = scmp.ge.s32.totalorder %s25, 8
      %s32 = sphi 0, %s44
      %s33 = sphi 0, %s40
      %s34 = sphi 0, %s32
      %s35 = sphi 0, %s33
      %s36 = sphi 0, %s34
      %s37 = sphi 0, %s35
      %s47 = sphi 0, %s49
      %s50 = sphi 0, %s47
      %s51 = sphi 0, %s50
      %s67 = sphi 0, %s51
      %s73 = sphi 0, %s75
      %s76 = sphi 0, %s73
      %s77 = sphi 0, %s76
      %s93 = sphi 0, %s77
      %s99 = sphi 0, %s101
      %s102 = sphi 0, %s99
      %s103 = sphi 0, %s102
      %s119 = sphi 0, %s103
      %s125 = sphi 0, %s127
      %s128 = sphi 0, %s125
      %s129 = sphi 0, %s128
      %s145 = sphi 0, %s129
      %s151 = sphi 0, %s153
      %s154 = sphi 0, %s151
      %s155 = sphi 0, %s154
      %s171 = sphi 0, %s155
      %s177 = sphi 0, %s179
      %s180 = sphi 0, %s177
      %s181 = sphi 0, %s180
      %s197 = sphi 0, %s181
      %s203 = sphi 0, %s205
      %s206 = sphi 0, %s203
      %s207 = sphi 0, %s206
      %s223 = sphi 0, %s207
      %s229 = sphi 0, %s231
      %s232 = sphi 0, %s229
      %s233 = sphi 0, %s232
      %s249 = sphi 0, %s233
    $region4: #{tpu_custom_call.1} parent=1 // loop_header_branch
      %28 = sbr.rel (%p26) target = $region8
    $region5: #{tpu_custom_call.1} parent=1 // loop_body
      %s30 = ssub.s32 %s25, 1
      %s31 = ssub.s32 %s25, 2
      %s38 = sadd.s32 1, %s33
      %p39 = scmp.ge.s32.totalorder %s38, 3
      %s40 = scalar_select %p39, 0, %s38
      %s41 = sadd.s32 1, %s32
      %s42 = scalar_select %p39, %s41, %s32
      %p43 = scmp.ge.s32.totalorder %s42, 2
      %s44 = scalar_select %p43, 0, %s42
      %s45 = ssub.s32 %s32, %s44
      %p46 = scmp.eq.s32.totalorder %s45, 0
      %s48 = sadd.s32 %s47, 1
      %s49 = scalar_select %p46, %s47, %s48
      %p52 = pneg %p46
      %p53 = scmp.eq.s32.totalorder %s25, 5
      %p54 = por %p52, %p53
      %p55 = scmp.ne.s32.totalorder %s47, %s50
      %p56 = scmp.eq.s32.totalorder %s25, 0
      %p57 = por %p55, %p56
      %p58 = scmp.ne.s32.totalorder %s47, %s50
      %p59 = scmp.eq.s32.totalorder %s30, 5
      %p60 = por %p58, %p59
      %p61 = scmp.ne.s32.totalorder %s50, %s51
      %p62 = scmp.eq.s32.totalorder %s30, 0
      %p63 = por %p61, %p62
      %p64 = scmp.ne.s32.totalorder %s50, %s51
      %p65 = scmp.eq.s32.totalorder %s31, 5
      %p66 = por %p64, %p65
      %p68 = scmp.ne.s32.totalorder %s51, %s67
      %p69 = scmp.eq.s32.totalorder %s31, 0
      %p70 = por %p68, %p69
      %s71 = ssub.s32 %s33, %s40
      %p72 = scmp.eq.s32.totalorder %s71, 0
      %s74 = sadd.s32 %s73, 1
      %s75 = scalar_select %p72, %s73, %s74
      %p78 = pneg %p72
      %p79 = scmp.eq.s32.totalorder %s25, 5
      %p80 = por %p78, %p79
      %p81 = scmp.ne.s32.totalorder %s73, %s76
      %p82 = scmp.eq.s32.totalorder %s25, 0
      %p83 = por %p81, %p82
      %p84 = scmp.ne.s32.totalorder %s73, %s76
      %p85 = scmp.eq.s32.totalorder %s30, 5
      %p86 = por %p84, %p85
      %p87 = scmp.ne.s32.totalorder %s76, %s77
      %p88 = scmp.eq.s32.totalorder %s30, 0
      %p89 = por %p87, %p88
      %p90 = scmp.ne.s32.totalorder %s76, %s77
      %p91 = scmp.eq.s32.totalorder %s31, 5
      %p92 = por %p90, %p91
      %p94 = scmp.ne.s32.totalorder %s77, %s93
      %p95 = scmp.eq.s32.totalorder %s31, 0
      %p96 = por %p94, %p95
      %s97 = ssub.s32 %s33, %s40
      %p98 = scmp.eq.s32.totalorder %s97, 0
      %s100 = sadd.s32 %s99, 1
      %s101 = scalar_select %p98, %s99, %s100
      %p104 = pneg %p98
      %p105 = scmp.eq.s32.totalorder %s25, 5
      %p106 = por %p104, %p105
      %p107 = scmp.ne.s32.totalorder %s99, %s102
      %p108 = scmp.eq.s32.totalorder %s25, 0
      %p109 = por %p107, %p108
      %p110 = scmp.ne.s32.totalorder %s99, %s102
      %p111 = scmp.eq.s32.totalorder %s30, 5
      %p112 = por %p110, %p111
      %p113 = scmp.ne.s32.totalorder %s102, %s103
      %p114 = scmp.eq.s32.totalorder %s30, 0
      %p115 = por %p113, %p114
      %p116 = scmp.ne.s32.totalorder %s102, %s103
      %p117 = scmp.eq.s32.totalorder %s31, 5
      %p118 = por %p116, %p117
      %p120 = scmp.ne.s32.totalorder %s103, %s119
      %p121 = scmp.eq.s32.totalorder %s31, 0
      %p122 = por %p120, %p121
      %s123 = ssub.s32 %s33, %s40
      %p124 = scmp.eq.s32.totalorder %s123, 0
      %s126 = sadd.s32 %s125, 1
      %s127 = scalar_select %p124, %s125, %s126
      %p130 = pneg %p124
      %p131 = scmp.eq.s32.totalorder %s25, 5
      %p132 = por %p130, %p131
      %p133 = scmp.ne.s32.totalorder %s125, %s128
      %p134 = scmp.eq.s32.totalorder %s25, 0
      %p135 = por %p133, %p134
      %p136 = scmp.ne.s32.totalorder %s125, %s128
      %p137 = scmp.eq.s32.totalorder %s30, 5
      %p138 = por %p136, %p137
      %p139 = scmp.ne.s32.totalorder %s128, %s129
      %p140 = scmp.eq.s32.totalorder %s30, 0
      %p141 = por %p139, %p140
      %p142 = scmp.ne.s32.totalorder %s128, %s129
      %p143 = scmp.eq.s32.totalorder %s31, 5
      %p144 = por %p142, %p143
      %p146 = scmp.ne.s32.totalorder %s129, %s145
      %p147 = scmp.eq.s32.totalorder %s31, 0
      %p148 = por %p146, %p147
      %s149 = ssub.s32 %s33, %s40
      %p150 = scmp.eq.s32.totalorder %s149, 0
      %s152 = sadd.s32 %s151, 1
      %s153 = scalar_select %p150, %s151, %s152
      %p156 = pneg %p150
      %p157 = scmp.eq.s32.totalorder %s25, 5
      %p158 = por %p156, %p157
      %p159 = scmp.ne.s32.totalorder %s151, %s154
      %p160 = scmp.eq.s32.totalorder %s25, 0
      %p161 = por %p159, %p160
      %p162 = scmp.ne.s32.totalorder %s151, %s154
      %p163 = scmp.eq.s32.totalorder %s30, 5
      %p164 = por %p162, %p163
      %p165 = scmp.ne.s32.totalorder %s154, %s155
      %p166 = scmp.eq.s32.totalorder %s30, 0
      %p167 = por %p165, %p166
      %p168 = scmp.ne.s32.totalorder %s154, %s155
      %p169 = scmp.eq.s32.totalorder %s31, 5
      %p170 = por %p168, %p169
      %p172 = scmp.ne.s32.totalorder %s155, %s171
      %p173 = scmp.eq.s32.totalorder %s31, 0
      %p174 = por %p172, %p173
      %s175 = ssub.s32 %s33, %s40
      %p176 = scmp.eq.s32.totalorder %s175, 0
      %s178 = sadd.s32 %s177, 1
      %s179 = scalar_select %p176, %s177, %s178
      %p182 = pneg %p176
      %p183 = scmp.eq.s32.totalorder %s25, 5
      %p184 = por %p182, %p183
      %p185 = scmp.ne.s32.totalorder %s177, %s180
      %p186 = scmp.eq.s32.totalorder %s25, 0
      %p187 = por %p185, %p186
      %p188 = scmp.ne.s32.totalorder %s177, %s180
      %p189 = scmp.eq.s32.totalorder %s30, 5
      %p190 = por %p188, %p189
      %p191 = scmp.ne.s32.totalorder %s180, %s181
      %p192 = scmp.eq.s32.totalorder %s30, 0
      %p193 = por %p191, %p192
      %p194 = scmp.ne.s32.totalorder %s180, %s181
      %p195 = scmp.eq.s32.totalorder %s31, 5
      %p196 = por %p194, %p195
      %p198 = scmp.ne.s32.totalorder %s181, %s197
      %p199 = scmp.eq.s32.totalorder %s31, 0
      %p200 = por %p198, %p199
      %s201 = ssub.s32 %s33, %s40
      %p202 = scmp.eq.s32.totalorder %s201, 0
      %s204 = sadd.s32 %s203, 1
      %s205 = scalar_select %p202, %s203, %s204
      %p208 = pneg %p202
      %p209 = scmp.eq.s32.totalorder %s25, 5
      %p210 = por %p208, %p209
      %p211 = scmp.ne.s32.totalorder %s203, %s206
      %p212 = scmp.eq.s32.totalorder %s25, 0
      %p213 = por %p211, %p212
      %p214 = scmp.ne.s32.totalorder %s203, %s206
      %p215 = scmp.eq.s32.totalorder %s30, 5
      %p216 = por %p214, %p215
      %p217 = scmp.ne.s32.totalorder %s206, %s207
      %p218 = scmp.eq.s32.totalorder %s30, 0
      %p219 = por %p217, %p218
      %p220 = scmp.ne.s32.totalorder %s206, %s207
      %p221 = scmp.eq.s32.totalorder %s31, 5
      %p222 = por %p220, %p221
      %p224 = scmp.ne.s32.totalorder %s207, %s223
      %p225 = scmp.eq.s32.totalorder %s31, 0
      %p226 = por %p224, %p225
      %s227 = ssub.s32 %s32, %s44
      %p228 = scmp.eq.s32.totalorder %s227, 0
      %s230 = sadd.s32 %s229, 1
      %s231 = scalar_select %p228, %s229, %s230
      %p234 = pneg %p228
      %p235 = scmp.eq.s32.totalorder %s25, 5
      %p236 = por %p234, %p235
      %p237 = scmp.ne.s32.totalorder %s229, %s232
      %p238 = scmp.eq.s32.totalorder %s25, 0
      %p239 = por %p237, %p238
      %p240 = scmp.ne.s32.totalorder %s229, %s232
      %p241 = scmp.eq.s32.totalorder %s30, 5
      %p242 = por %p240, %p241
      %p243 = scmp.ne.s32.totalorder %s232, %s233
      %p244 = scmp.eq.s32.totalorder %s30, 0
      %p245 = por %p243, %p244
      %p246 = scmp.ne.s32.totalorder %s232, %s233
      %p247 = scmp.eq.s32.totalorder %s31, 5
      %p248 = por %p246, %p247
      %p250 = scmp.ne.s32.totalorder %s233, %s249
      %p251 = scmp.eq.s32.totalorder %s31, 0
      %p252 = por %p250, %p251
      %p253 = scmp.le.s32.totalorder 1, %s25
      %p254 = scmp.lt.s32.totalorder %s25, 7
      %p255 = pnand %p253, %p254
      %p256 = pneg %p255
      // Predicated region
      $region9: #{tpu_custom_call.1} parent=5 // pred_check
        _
      $region10: #{tpu_custom_call.1} parent=5 // pred_check_branch
        %258 = sbr.rel (%p255) target = $region12
      $region11: #{tpu_custom_call.1} parent=5 // pred_region
        %s259 = ssub.s32 %s25, 1
      $region12: #{tpu_custom_call.1} parent=5 // pred_fallthru
        _
      %p260 = scmp.lt.s32.totalorder %s25, 6
      // Predicated region
      $region13: #{tpu_custom_call.1} parent=5 // pred_check
        %p261 = pneg %p260
      $region14: #{tpu_custom_call.1} parent=5 // pred_check_branch
        %263 = sbr.rel (%p261) target = $region16
      $region15: #{tpu_custom_call.1} parent=5 // pred_region
        // Predicated region
        $region17: #{tpu_custom_call.1} parent=15 // pred_check
          %p264 = pneg %p57
        $region18: #{tpu_custom_call.1} parent=15 // pred_check_branch
          %266 = sbr.rel (%p264) target = $region20
        $region19: #{tpu_custom_call.1} parent=15 // pred_region
          %s267 = sand.u32 %s47, 1
          %s268 = scalar_lea.sflag [#allocation4], %s267
          %s269 = sand.u32 %s47, 1
          %s270 = smul.addr %s269, 64
          %s271 = scalar_lea.vmem [#allocation3], %s270
          %s272 = smul.u32 8, %s32
          %s274 = ssub.s32 1024, 1024
          %275 = vsyncadd %s268, %s274
          %s276 = smul.addr %s272, 128
          %s277 = scalar_lea.hbm %s0, %s276
          %s278 = sshll.u32 %s271, 4
          %s279 = int_to_ptr.vmem [resolvable:$true] %s278
          %284 = dma.hbm_to_vmem [thread:$0]  %s277, 1024, %s279, %s268, 128, 128, 8
        $region20: #{tpu_custom_call.1} parent=15 // pred_fallthru
          _
        // Predicated region
        $region21: #{tpu_custom_call.1} parent=15 // pred_check
          %p285 = pneg %p83
        $region22: #{tpu_custom_call.1} parent=15 // pred_check_branch
          %287 = sbr.rel (%p285) target = $region24
        $region23: #{tpu_custom_call.1} parent=15 // pred_region
          %s288 = sand.u32 %s25, 1
          %s289 = scalar_lea.sflag [#allocation7], %s288
          %s290 = sand.u32 %s73, 1
          %s291 = smul.addr %s290, 64
          %s292 = scalar_lea.vmem [#allocation6], %s291
          %s294 = ssub.s32 1024, 1024
          %295 = vsyncadd %s289, %s294
          %s296 = smul.addr %s33, 16
          %s297 = smul.addr %s296, 64
          %s298 = scalar_lea.hbm %s1, %s297
          %s299 = sshll.u32 %s292, 4
          %s300 = int_to_ptr.vmem [resolvable:$true] %s299
          %305 = dma.hbm_to_vmem [thread:$0]  %s298, 1024, %s300, %s289, 64, 64, 4
        $region24: #{tpu_custom_call.1} parent=15 // pred_fallthru
          _
        // Predicated region
        $region25: #{tpu_custom_call.1} parent=15 // pred_check
          %p306 = pneg %p109
        $region26: #{tpu_custom_call.1} parent=15 // pred_check_branch
          %308 = sbr.rel (%p306) target = $region28
        $region27: #{tpu_custom_call.1} parent=15 // pred_region
          %p309 = scmp.lt.s32.totalorder %s33, 2
          %s310 = scalar_select %p309, %s33, 2
          %s311 = scalar_lea.vmem %s2, %s310
        $region28: #{tpu_custom_call.1} parent=15 // pred_fallthru
          _
        // Predicated region
        $region29: #{tpu_custom_call.1} parent=15 // pred_check
          %p312 = pneg %p135
        $region30: #{tpu_custom_call.1} parent=15 // pred_check_branch
          %314 = sbr.rel (%p312) target = $region32
        $region31: #{tpu_custom_call.1} parent=15 // pred_region
          %s315 = sand.u32 %s25, 1
          %s316 = scalar_lea.sflag [#allocation7], %s315
          %s317 = sand.u32 %s125, 1
          %s318 = smul.addr %s317, 64
          %s319 = scalar_lea.vmem [#allocation8], %s318
          %s321 = ssub.s32 1024, 1024
          %322 = vsyncadd %s316, %s321
          %s323 = smul.addr %s33, 16
          %s324 = smul.addr %s323, 64
          %s325 = scalar_lea.hbm %s3, %s324
          %s326 = sshll.u32 %s319, 4
          %s327 = int_to_ptr.vmem [resolvable:$true] %s326
          %332 = dma.hbm_to_vmem [thread:$0]  %s325, 1024, %s327, %s316, 64, 64, 4
        $region32: #{tpu_custom_call.1} parent=15 // pred_fallthru
          _
        // Predicated region
        $region33: #{tpu_custom_call.1} parent=15 // pred_check
          %p333 = pneg %p161
        $region34: #{tpu_custom_call.1} parent=15 // pred_check_branch
          %335 = sbr.rel (%p333) target = $region36
        $region35: #{tpu_custom_call.1} parent=15 // pred_region
          %p336 = scmp.lt.s32.totalorder %s33, 2
          %s337 = scalar_select %p336, %s33, 2
          %s338 = scalar_lea.vmem %s4, %s337
        $region36: #{tpu_custom_call.1} parent=15 // pred_fallthru
          _
        // Predicated region
        $region37: #{tpu_custom_call.1} parent=15 // pred_check
          %p339 = pneg %p187
        $region38: #{tpu_custom_call.1} parent=15 // pred_check_branch
          %341 = sbr.rel (%p339) target = $region40
        $region39: #{tpu_custom_call.1} parent=15 // pred_region
          %p342 = scmp.lt.s32.totalorder %s33, 2
          %s343 = scalar_select %p342, %s33, 2
          %s344 = scalar_lea.vmem %s5, %s343
        $region40: #{tpu_custom_call.1} parent=15 // pred_fallthru
          _
        // Predicated region
        $region41: #{tpu_custom_call.1} parent=15 // pred_check
          %p345 = pneg %p213
        $region42: #{tpu_custom_call.1} parent=15 // pred_check_branch
          %347 = sbr.rel (%p345) target = $region44
        $region43: #{tpu_custom_call.1} parent=15 // pred_region
          %s348 = sand.u32 %s203, 1
          %s349 = scalar_lea.sflag [#allocation10], %s348
          %s350 = sand.u32 %s203, 1
          %s351 = scalar_lea.vmem [#allocation9], %s350
          %s353 = ssub.s32 16, 16
          %354 = vsyncadd %s349, %s353
          %s355 = smul.addr %s33, 16
          %s356 = scalar_lea.hbm %s6, %s355
          %s358 = sshll.u32 %s351, 4
          %s359 = int_to_ptr.vmem [resolvable:$true] %s358
          %361 = dma.hbm_to_vmem [thread:$0]  %s356, 16, %s359, %s349
        $region44: #{tpu_custom_call.1} parent=15 // pred_fallthru
          _
      $region16: #{tpu_custom_call.1} parent=5 // pred_fallthru
        _
      %p362 = scmp.le.s32.totalorder 1, %s25
      %p363 = scmp.lt.s32.totalorder %s25, 7
      %p364 = pnand %p362, %p363
      %p365 = pneg %p364
      // Predicated region
      $region45: #{tpu_custom_call.1} parent=5 // pred_check
        _
      $region46: #{tpu_custom_call.1} parent=5 // pred_check_branch
        %367 = sbr.rel (%p364) target = $region48
      $region47: #{tpu_custom_call.1} parent=5 // pred_region
        %s368 = ssub.s32 %s25, 1
        %s369 = sand.u32 %s50, 1
        %s370 = scalar_lea.sflag [#allocation4], %s369
        %s371 = sand.u32 %s50, 1
        %s372 = smul.addr %s371, 64
        %s373 = scalar_lea.vmem [#allocation3], %s372
        // Predicated region
        $region49: #{tpu_custom_call.1} parent=47 // pred_check
          %p374 = pneg %p63
        $region50: #{tpu_custom_call.1} parent=47 // pred_check_branch
          %376 = sbr.rel (%p374) target = $region52
        $region51: #{tpu_custom_call.1} parent=47 // pred_region
          %377 = dma.done %s370, 1024
        $region52: #{tpu_custom_call.1} parent=47 // pred_fallthru
          _
        %s378 = sand.u32 %s30, 1
        %s379 = scalar_lea.sflag [#allocation7], %s378
        %s380 = sand.u32 %s76, 1
        %s381 = smul.addr %s380, 64
        %s382 = scalar_lea.vmem [#allocation6], %s381
        // Predicated region
        $region53: #{tpu_custom_call.1} parent=47 // pred_check
          %p383 = pneg %p89
        $region54: #{tpu_custom_call.1} parent=47 // pred_check_branch
          %385 = sbr.rel (%p383) target = $region56
        $region55: #{tpu_custom_call.1} parent=47 // pred_region
          %386 = dma.done %s379, 1024
        $region56: #{tpu_custom_call.1} parent=47 // pred_fallthru
          _
        %s387 = sand.u32 %s30, 1
        %s388 = scalar_lea.sflag [#allocation7], %s387
        %s389 = sand.u32 %s128, 1
        %s390 = smul.addr %s389, 64
        %s391 = scalar_lea.vmem [#allocation8], %s390
        // Predicated region
        $region57: #{tpu_custom_call.1} parent=47 // pred_check
          %p392 = pneg %p141
        $region58: #{tpu_custom_call.1} parent=47 // pred_check_branch
          %394 = sbr.rel (%p392) target = $region60
        $region59: #{tpu_custom_call.1} parent=47 // pred_region
          %395 = dma.done %s388, 1024
        $region60: #{tpu_custom_call.1} parent=47 // pred_fallthru
          _
        %s396 = sand.u32 %s206, 1
        %s397 = scalar_lea.sflag [#allocation10], %s396
        %s398 = sand.u32 %s206, 1
        %s399 = scalar_lea.vmem [#allocation9], %s398
        // Predicated region
        $region61: #{tpu_custom_call.1} parent=47 // pred_check
          %p400 = pneg %p219
        $region62: #{tpu_custom_call.1} parent=47 // pred_check_branch
          %402 = sbr.rel (%p400) target = $region64
        $region63: #{tpu_custom_call.1} parent=47 // pred_region
          %403 = dma.done %s397, 16
        $region64: #{tpu_custom_call.1} parent=47 // pred_fallthru
          _
        %s404 = sand.u32 %s50, 1
        %s405 = scalar_lea.sflag [#allocation4], %s404
        %s406 = sand.u32 %s50, 1
        %s407 = smul.addr %s406, 64
        %s408 = scalar_lea.vmem [#allocation3], %s407
        %p409 = pneg %p63
        %p410 = pneg %p60
        %s411 = sand.u32 %s30, 1
        %s412 = scalar_lea.sflag [#allocation7], %s411
        %s413 = sand.u32 %s76, 1
        %s414 = smul.addr %s413, 64
        %s415 = scalar_lea.vmem [#allocation6], %s414
        %p416 = pneg %p89
        %p417 = pneg %p86
        %p418 = scmp.lt.s32.totalorder %s35, 2
        %s419 = scalar_select %p418, %s35, 2
        %s420 = scalar_lea.vmem %s2, %s419
        %p421 = pneg %p115
        %p422 = pneg %p112
        %s423 = sand.u32 %s30, 1
        %s424 = scalar_lea.sflag [#allocation7], %s423
        %s425 = sand.u32 %s128, 1
        %s426 = smul.addr %s425, 64
        %s427 = scalar_lea.vmem [#allocation8], %s426
        %p428 = pneg %p141
        %p429 = pneg %p138
        %p430 = scmp.lt.s32.totalorder %s35, 2
        %s431 = scalar_select %p430, %s35, 2
        %s432 = scalar_lea.vmem %s4, %s431
        %p433 = pneg %p167
        %p434 = pneg %p164
        %p435 = scmp.lt.s32.totalorder %s35, 2
        %s436 = scalar_select %p435, %s35, 2
        %s437 = scalar_lea.vmem %s5, %s436
        %p438 = pneg %p193
        %p439 = pneg %p190
        %s440 = sand.u32 %s206, 1
        %s441 = scalar_lea.sflag [#allocation10], %s440
        %s442 = sand.u32 %s206, 1
        %s443 = scalar_lea.vmem [#allocation9], %s442
        %p444 = pneg %p219
        %p445 = pneg %p216
        %p446 = pneg %p245
        %p447 = pneg %p242
        %s448 = sand.u32 %s232, 1
        %s449 = scalar_lea.sflag [#allocation5], %s448
        %s450 = sand.u32 %s232, 1
        %s451 = smul.addr %s450, 64
        %s452 = scalar_lea.vmem [#allocation11], %s451
        %s453 = smul.u32 8, %s34
        %p454 = scmp.lt.s32.totalorder %s35, 2
        %s455 = scalar_select %p454, %s35, 2
        %s456 = scalar_lea.vmem %s2, %s455
        %p457 = scmp.lt.s32.totalorder %s35, 2
        %s458 = scalar_select %p457, %s35, 2
        %s459 = scalar_lea.vmem %s4, %s458
        %p460 = scmp.lt.s32.totalorder %s35, 2
        %s461 = scalar_select %p460, %s35, 2
        %s462 = scalar_lea.vmem %s5, %s461
        %s463 = smul.u32 8, %s34
        %p465 = scmp.eq.s32.totalorder %s35, 0
        // Predicated region
        $region65: #{tpu_custom_call.1} parent=47 // pred_check
          %p466 = pneg %p465
        $region66: #{tpu_custom_call.1} parent=47 // pred_check_branch
          %468 = sbr.rel (%p466) target = $region68
        $region67: #{tpu_custom_call.1} parent=47 // pred_region
          %v469 = vld [vmem:[%s373] sm:$0xff]
          %v470 = vld [vmem:[%s373 + $0x8] sm:$0xff]
          %v471 = vld [vmem:[%s373 + $0x10] sm:$0xff]
          %v472 = vld [vmem:[%s373 + $0x18] sm:$0xff]
          %v473 = vld [vmem:[%s373 + $0x20] sm:$0xff]
          %v474 = vld [vmem:[%s373 + $0x28] sm:$0xff]
          %v475 = vld [vmem:[%s373 + $0x30] sm:$0xff]
          %v476 = vld [vmem:[%s373 + $0x38] sm:$0xff]
          %477 = vst [vmem:[#allocation2] sm:$0xff] %v469
          %478 = vst [vmem:[#allocation2 + $0x8] sm:$0xff] %v470
          %479 = vst [vmem:[#allocation2 + $0x10] sm:$0xff] %v471
          %480 = vst [vmem:[#allocation2 + $0x18] sm:$0xff] %v472
          %481 = vst [vmem:[#allocation2 + $0x20] sm:$0xff] %v473
          %482 = vst [vmem:[#allocation2 + $0x28] sm:$0xff] %v474
          %483 = vst [vmem:[#allocation2 + $0x30] sm:$0xff] %v475
          %484 = vst [vmem:[#allocation2 + $0x38] sm:$0xff] %v476
        $region68: #{tpu_custom_call.1} parent=47 // pred_fallthru
          _
        %v485 = vld [vmem:[#allocation2] sm:$0xff]
        %v486 = vld [vmem:[#allocation2 + $0x8] sm:$0xff]
        %v487 = vld [vmem:[#allocation2 + $0x10] sm:$0xff]
        %v488 = vld [vmem:[#allocation2 + $0x18] sm:$0xff]
        %v489 = vld [vmem:[#allocation2 + $0x20] sm:$0xff]
        %v490 = vld [vmem:[#allocation2 + $0x28] sm:$0xff]
        %v491 = vld [vmem:[#allocation2 + $0x30] sm:$0xff]
        %v492 = vld [vmem:[#allocation2 + $0x38] sm:$0xff]
        %v493 = vpack.c.bf16 %v486, %v485
        %v494 = vpack.c.bf16 %v488, %v487
        %v495 = vpack.c.bf16 %v490, %v489
        %v496 = vpack.c.bf16 %v492, %v491
        %v497 = vld [vmem:[%s382] sm:$0xf]
        %v498 = vld [vmem:[%s382 + $0x4] sm:$0xf]
        %v499 = vld [vmem:[%s382 + $0x8] sm:$0xf]
        %v500 = vld [vmem:[%s382 + $0xc] sm:$0xf]
        %v501 = vld [vmem:[%s382 + $0x10] sm:$0xf]
        %v502 = vld [vmem:[%s382 + $0x14] sm:$0xf]
        %v503 = vld [vmem:[%s382 + $0x18] sm:$0xf]
        %v504 = vld [vmem:[%s382 + $0x1c] sm:$0xf]
        %v505 = vld [vmem:[%s382 + $0x20] sm:$0xf]
        %v506 = vld [vmem:[%s382 + $0x24] sm:$0xf]
        %v507 = vld [vmem:[%s382 + $0x28] sm:$0xf]
        %v508 = vld [vmem:[%s382 + $0x2c] sm:$0xf]
        %v509 = vld [vmem:[%s382 + $0x30] sm:$0xf]
        %v510 = vld [vmem:[%s382 + $0x34] sm:$0xf]
        %v511 = vld [vmem:[%s382 + $0x38] sm:$0xf]
        %v512 = vld [vmem:[%s382 + $0x3c] sm:$0xf]
        %v513 = vld [vmem:[%s456] sm:$0x1]
        %v515 = vlaneseq
        %v516 = vshrl.u32 %v515, 7
        %v517 = vsub.s32 0, %v516
        %v518 = vrot.slane %v513, %v517
        %v536 = vunpack.c.l.b16 %v497
        %v537 = vunpack.c.l.b16 %v498
        %v538 = vunpack.c.l.b16 %v499
        %v539 = vunpack.c.l.b16 %v500
        %v540 = vunpack.c.l.b16 %v501
        %v541 = vunpack.c.l.b16 %v502
        %v542 = vunpack.c.l.b16 %v503
        %v543 = vunpack.c.l.b16 %v504
        %v544 = vunpack.c.l.b16 %v505
        %v545 = vunpack.c.l.b16 %v506
        %v546 = vunpack.c.l.b16 %v507
        %v547 = vunpack.c.l.b16 %v508
        %v548 = vunpack.c.l.b16 %v509
        %v549 = vunpack.c.l.b16 %v510
        %v550 = vunpack.c.l.b16 %v511
        %v551 = vunpack.c.l.b16 %v512
        %v552 = vpack.c.b16 %v537, %v536
        %v553 = vpack.c.b16 %v539, %v538
        %v554 = vpack.c.b16 %v541, %v540
        %v555 = vpack.c.b16 %v543, %v542
        %v556 = vpack.c.b16 %v545, %v544
        %v557 = vpack.c.b16 %v547, %v546
        %v558 = vpack.c.b16 %v549, %v548
        %v559 = vpack.c.b16 %v551, %v550
        %568 = vmatprep.subr.bf16.mxu0 0
        %569 = vmatpush1.bf16.msra.mxu0 %v559
        %570 = vmatprep.subr.bf16.mxu0 0
        %571 = vmatpush1.bf16.msra.mxu0 %v558
        %572 = vmatprep.subr.bf16.mxu0 0
        %573 = vmatpush1.bf16.msra.mxu0 %v557
        %574 = vmatprep.subr.bf16.mxu0 0
        %575 = vmatpush1.bf16.msra.mxu0 %v556
        %576 = vmatprep.subr.bf16.mxu0 0
        %577 = vmatpush1.bf16.msra.mxu0 %v555
        %578 = vmatprep.subr.bf16.mxu0 0
        %579 = vmatpush1.bf16.msra.mxu0 %v554
        %580 = vmatprep.subr.bf16.mxu0 0
        %581 = vmatpush1.bf16.msra.mxu0 %v553
        %582 = vmatprep.subr.bf16.mxu0 0
        %583 = vmatpush1.bf16.msra.mxu0 %v552
        %584 = vmatprep.subr.bf16.mxu0 0
        %585 = vmatpush2.bf16.msra.mxu0 0
        %586 = vmatprep.subr.bf16.mxu0 0
        %587 = vmatpush2.bf16.msra.mxu0 0
        %588 = vmatprep.subr.bf16.mxu0 0
        %589 = vmatpush2.bf16.msra.mxu0 0
        %590 = vmatprep.subr.bf16.mxu0 0
        %591 = vmatpush2.bf16.msra.mxu0 0
        %592 = vmatprep.subr.bf16.mxu0 0
        %593 = vmatpush2.bf16.msra.mxu0 0
        %594 = vmatprep.subr.bf16.mxu0 0
        %595 = vmatpush2.bf16.msra.mxu0 0
        %596 = vmatprep.subr.bf16.mxu0 0
        %597 = vmatpush2.bf16.msra.mxu0 0
        %598 = vmatprep.subr.bf16.mxu0 0
        %599 = vmatpush2.bf16.msra.mxu0 0
        %600 = vmatprep.mubr.bf16.mxu0 0
        %601 = vmatmul.mubr.bf16.gmra.mxu0 %v493
        %v602 = vpop.f32.mrf.mxu0
        %v603 = vadd.f32 %v518, %v602
        %v604 = vpop.f32.mrf.mxu0
        %v605 = vpop.f32.mrf.mxu0
        %v606 = vadd.f32 %v518, %v605
        %v607 = vpop.f32.mrf.mxu0
        %608 = vmatprep.mubr.bf16.mxu0 0
        %609 = vmatmul.mubr.bf16.gmra.mxu0 %v494
        %v610 = vpop.f32.mrf.mxu0
        %v611 = vadd.f32 %v518, %v610
        %v612 = vpop.f32.mrf.mxu0
        %v613 = vpop.f32.mrf.mxu0
        %v614 = vadd.f32 %v518, %v613
        %v615 = vpop.f32.mrf.mxu0
        %616 = vmatprep.mubr.bf16.mxu0 0
        %617 = vmatmul.mubr.bf16.gmra.mxu0 %v495
        %v618 = vpop.f32.mrf.mxu0
        %v619 = vadd.f32 %v518, %v618
        %v620 = vpop.f32.mrf.mxu0
        %v621 = vpop.f32.mrf.mxu0
        %v622 = vadd.f32 %v518, %v621
        %v623 = vpop.f32.mrf.mxu0
        %624 = vmatprep.mubr.bf16.mxu0 0
        %625 = vmatmul.mubr.bf16.gmra.mxu0 %v496
        %v626 = vpop.f32.mrf.mxu0
        %v627 = vadd.f32 %v518, %v626
        %v628 = vpop.f32.mrf.mxu0
        %v629 = vpop.f32.mrf.mxu0
        %v630 = vadd.f32 %v518, %v629
        %v631 = vpop.f32.mrf.mxu0
        %632 = vdwg.mxu0
        %v633 = vmax.f32 %v603, 0.0
        %v634 = vmax.f32 %v606, 0.0
        %v635 = vmax.f32 %v611, 0.0
        %v636 = vmax.f32 %v614, 0.0
        %v637 = vmax.f32 %v619, 0.0
        %v638 = vmax.f32 %v622, 0.0
        %v639 = vmax.f32 %v627, 0.0
        %v640 = vmax.f32 %v630, 0.0
        %v641 = vpack.c.bf16 %v634, %v633
        %v642 = vpack.c.bf16 %v636, %v635
        %v643 = vpack.c.bf16 %v638, %v637
        %v644 = vpack.c.bf16 %v640, %v639
        %v645 = vld [vmem:[%s391] sm:$0xf]
        %v646 = vld [vmem:[%s391 + $0x4] sm:$0xf]
        %v647 = vld [vmem:[%s391 + $0x8] sm:$0xf]
        %v648 = vld [vmem:[%s391 + $0xc] sm:$0xf]
        %v649 = vld [vmem:[%s391 + $0x10] sm:$0xf]
        %v650 = vld [vmem:[%s391 + $0x14] sm:$0xf]
        %v651 = vld [vmem:[%s391 + $0x18] sm:$0xf]
        %v652 = vld [vmem:[%s391 + $0x1c] sm:$0xf]
        %v653 = vld [vmem:[%s391 + $0x20] sm:$0xf]
        %v654 = vld [vmem:[%s391 + $0x24] sm:$0xf]
        %v655 = vld [vmem:[%s391 + $0x28] sm:$0xf]
        %v656 = vld [vmem:[%s391 + $0x2c] sm:$0xf]
        %v657 = vld [vmem:[%s391 + $0x30] sm:$0xf]
        %v658 = vld [vmem:[%s391 + $0x34] sm:$0xf]
        %v659 = vld [vmem:[%s391 + $0x38] sm:$0xf]
        %v660 = vld [vmem:[%s391 + $0x3c] sm:$0xf]
        %v661 = vld [vmem:[%s459] sm:$0x1]
        %v663 = vlaneseq
        %v664 = vshrl.u32 %v663, 7
        %v665 = vsub.s32 0, %v664
        %v666 = vrot.slane %v661, %v665
        %v684 = vunpack.c.l.b16 %v645
        %v685 = vunpack.c.l.b16 %v646
        %v686 = vunpack.c.l.b16 %v647
        %v687 = vunpack.c.l.b16 %v648
        %v688 = vunpack.c.l.b16 %v649
        %v689 = vunpack.c.l.b16 %v650
        %v690 = vunpack.c.l.b16 %v651
        %v691 = vunpack.c.l.b16 %v652
        %v692 = vunpack.c.l.b16 %v653
        %v693 = vunpack.c.l.b16 %v654
        %v694 = vunpack.c.l.b16 %v655
        %v695 = vunpack.c.l.b16 %v656
        %v696 = vunpack.c.l.b16 %v657
        %v697 = vunpack.c.l.b16 %v658
        %v698 = vunpack.c.l.b16 %v659
        %v699 = vunpack.c.l.b16 %v660
        %v700 = vpack.c.b16 %v685, %v684
        %v701 = vpack.c.b16 %v687, %v686
        %v702 = vpack.c.b16 %v689, %v688
        %v703 = vpack.c.b16 %v691, %v690
        %v704 = vpack.c.b16 %v693, %v692
        %v705 = vpack.c.b16 %v695, %v694
        %v706 = vpack.c.b16 %v697, %v696
        %v707 = vpack.c.b16 %v699, %v698
        %716 = vmatprep.subr.bf16.mxu0 0
        %717 = vmatpush1.bf16.msra.mxu0 %v707
        %718 = vmatprep.subr.bf16.mxu0 0
        %719 = vmatpush1.bf16.msra.mxu0 %v706
        %720 = vmatprep.subr.bf16.mxu0 0
        %721 = vmatpush1.bf16.msra.mxu0 %v705
        %722 = vmatprep.subr.bf16.mxu0 0
        %723 = vmatpush1.bf16.msra.mxu0 %v704
        %724 = vmatprep.subr.bf16.mxu0 0
        %725 = vmatpush1.bf16.msra.mxu0 %v703
        %726 = vmatprep.subr.bf16.mxu0 0
        %727 = vmatpush1.bf16.msra.mxu0 %v702
        %728 = vmatprep.subr.bf16.mxu0 0
        %729 = vmatpush1.bf16.msra.mxu0 %v701
        %730 = vmatprep.subr.bf16.mxu0 0
        %731 = vmatpush1.bf16.msra.mxu0 %v700
        %732 = vmatprep.subr.bf16.mxu0 0
        %733 = vmatpush2.bf16.msra.mxu0 0
        %734 = vmatprep.subr.bf16.mxu0 0
        %735 = vmatpush2.bf16.msra.mxu0 0
        %736 = vmatprep.subr.bf16.mxu0 0
        %737 = vmatpush2.bf16.msra.mxu0 0
        %738 = vmatprep.subr.bf16.mxu0 0
        %739 = vmatpush2.bf16.msra.mxu0 0
        %740 = vmatprep.subr.bf16.mxu0 0
        %741 = vmatpush2.bf16.msra.mxu0 0
        %742 = vmatprep.subr.bf16.mxu0 0
        %743 = vmatpush2.bf16.msra.mxu0 0
        %744 = vmatprep.subr.bf16.mxu0 0
        %745 = vmatpush2.bf16.msra.mxu0 0
        %746 = vmatprep.subr.bf16.mxu0 0
        %747 = vmatpush2.bf16.msra.mxu0 0
        %748 = vmatprep.mubr.bf16.mxu0 0
        %749 = vmatmul.mubr.bf16.gmra.mxu0 %v641
        %v750 = vpop.f32.mrf.mxu0
        %v751 = vadd.f32 %v666, %v750
        %v752 = vpop.f32.mrf.mxu0
        %v753 = vpop.f32.mrf.mxu0
        %v754 = vadd.f32 %v666, %v753
        %v755 = vpop.f32.mrf.mxu0
        %756 = vmatprep.mubr.bf16.mxu0 0
        %757 = vmatmul.mubr.bf16.gmra.mxu0 %v642
        %v758 = vpop.f32.mrf.mxu0
        %v759 = vadd.f32 %v666, %v758
        %v760 = vpop.f32.mrf.mxu0
        %v761 = vpop.f32.mrf.mxu0
        %v762 = vadd.f32 %v666, %v761
        %v763 = vpop.f32.mrf.mxu0
        %764 = vmatprep.mubr.bf16.mxu0 0
        %765 = vmatmul.mubr.bf16.gmra.mxu0 %v643
        %v766 = vpop.f32.mrf.mxu0
        %v767 = vadd.f32 %v666, %v766
        %v768 = vpop.f32.mrf.mxu0
        %v769 = vpop.f32.mrf.mxu0
        %v770 = vadd.f32 %v666, %v769
        %v771 = vpop.f32.mrf.mxu0
        %772 = vmatprep.mubr.bf16.mxu0 0
        %773 = vmatmul.mubr.bf16.gmra.mxu0 %v644
        %v774 = vpop.f32.mrf.mxu0
        %v775 = vadd.f32 %v666, %v774
        %v776 = vpop.f32.mrf.mxu0
        %v777 = vpop.f32.mrf.mxu0
        %v778 = vadd.f32 %v666, %v777
        %v779 = vpop.f32.mrf.mxu0
        %780 = vdwg.mxu0
        %v781 = vadd.f32 %v751, %v485
        %v782 = vadd.f32 %v754, %v486
        %v783 = vadd.f32 %v759, %v487
        %v784 = vadd.f32 %v762, %v488
        %v785 = vadd.f32 %v767, %v489
        %v786 = vadd.f32 %v770, %v490
        %v787 = vadd.f32 %v775, %v491
        %v788 = vadd.f32 %v778, %v492
        %789 = vadd.xlane.f32.xlu0 %v781
        %v790 = vpop.xlane.xlu0 %789
        %791 = vadd.xlane.f32.xlu0 %v782
        %v792 = vpop.xlane.xlu0 %791
        %793 = vadd.xlane.f32.xlu0 %v783
        %v794 = vpop.xlane.xlu0 %793
        %795 = vadd.xlane.f32.xlu0 %v784
        %v796 = vpop.xlane.xlu0 %795
        %797 = vadd.xlane.f32.xlu0 %v785
        %v798 = vpop.xlane.xlu0 %797
        %799 = vadd.xlane.f32.xlu0 %v786
        %v800 = vpop.xlane.xlu0 %799
        %801 = vadd.xlane.f32.xlu0 %v787
        %v802 = vpop.xlane.xlu0 %801
        %803 = vadd.xlane.f32.xlu0 %v788
        %v804 = vpop.xlane.xlu0 %803
        %v805 = vrcp.pop 128.0
        %v806 = vmul.f32 %v790, %v805
        %v807 = vmul.f32 %v792, %v805
        %v808 = vmul.f32 %v794, %v805
        %v809 = vmul.f32 %v796, %v805
        %v810 = vmul.f32 %v798, %v805
        %v811 = vmul.f32 %v800, %v805
        %v812 = vmul.f32 %v802, %v805
        %v813 = vmul.f32 %v804, %v805
        %v814 = vsub.f32 %v781, %v806
        %v815 = vsub.f32 %v782, %v807
        %v816 = vsub.f32 %v783, %v808
        %v817 = vsub.f32 %v784, %v809
        %v818 = vsub.f32 %v785, %v810
        %v819 = vsub.f32 %v786, %v811
        %v820 = vsub.f32 %v787, %v812
        %v821 = vsub.f32 %v788, %v813
        %v822 = vmul.f32 %v814, %v814
        %v823 = vmul.f32 %v815, %v815
        %v824 = vmul.f32 %v816, %v816
        %v825 = vmul.f32 %v817, %v817
        %v826 = vmul.f32 %v818, %v818
        %v827 = vmul.f32 %v819, %v819
        %v828 = vmul.f32 %v820, %v820
        %v829 = vmul.f32 %v821, %v821
        %830 = vadd.xlane.f32.xlu0 %v822
        %v831 = vpop.xlane.xlu0 %830
        %832 = vadd.xlane.f32.xlu0 %v823
        %v833 = vpop.xlane.xlu0 %832
        %834 = vadd.xlane.f32.xlu0 %v824
        %v835 = vpop.xlane.xlu0 %834
        %836 = vadd.xlane.f32.xlu0 %v825
        %v837 = vpop.xlane.xlu0 %836
        %838 = vadd.xlane.f32.xlu0 %v826
        %v839 = vpop.xlane.xlu0 %838
        %840 = vadd.xlane.f32.xlu0 %v827
        %v841 = vpop.xlane.xlu0 %840
        %842 = vadd.xlane.f32.xlu0 %v828
        %v843 = vpop.xlane.xlu0 %842
        %844 = vadd.xlane.f32.xlu0 %v829
        %v845 = vpop.xlane.xlu0 %844
        %v846 = vmul.f32 %v831, %v805
        %v847 = vmul.f32 %v833, %v805
        %v848 = vmul.f32 %v835, %v805
        %v849 = vmul.f32 %v837, %v805
        %v850 = vmul.f32 %v839, %v805
        %v851 = vmul.f32 %v841, %v805
        %v852 = vmul.f32 %v843, %v805
        %v853 = vmul.f32 %v845, %v805
        %v854 = vadd.f32 %v846, 1e-05
        %v855 = vadd.f32 %v847, 1e-05
        %v856 = vadd.f32 %v848, 1e-05
        %v857 = vadd.f32 %v849, 1e-05
        %v858 = vadd.f32 %v850, 1e-05
        %v859 = vadd.f32 %v851, 1e-05
        %v860 = vadd.f32 %v852, 1e-05
        %v861 = vadd.f32 %v853, 1e-05
        %v862 = vrsqrt.pop %v854
        %v863 = vrsqrt.pop %v855
        %v864 = vrsqrt.pop %v856
        %v865 = vrsqrt.pop %v857
        %v866 = vrsqrt.pop %v858
        %v867 = vrsqrt.pop %v859
        %v868 = vrsqrt.pop %v860
        %v869 = vrsqrt.pop %v861
        %v870 = vmul.f32 %v814, %v862
        %v871 = vmul.f32 %v815, %v863
        %v872 = vmul.f32 %v816, %v864
        %v873 = vmul.f32 %v817, %v865
        %v874 = vmul.f32 %v818, %v866
        %v875 = vmul.f32 %v819, %v867
        %v876 = vmul.f32 %v820, %v868
        %v877 = vmul.f32 %v821, %v869
        %v878 = vld [vmem:[%s462] sm:$0x1]
        %v880 = vlaneseq
        %v881 = vshrl.u32 %v880, 7
        %v882 = vsub.s32 0, %v881
        %v883 = vrot.slane %v878, %v882
        %v885 = vmul.f32 %v870, %v883
        %v886 = vmul.f32 %v871, %v883
        %v887 = vmul.f32 %v872, %v883
        %v888 = vmul.f32 %v873, %v883
        %v889 = vmul.f32 %v874, %v883
        %v890 = vmul.f32 %v875, %v883
        %v891 = vmul.f32 %v876, %v883
        %v892 = vmul.f32 %v877, %v883
        %v893 = vld [vmem:[%s399] sm:$0x1]
        %v895 = vlaneseq
        %v896 = vshrl.u32 %v895, 7
        %v897 = vsub.s32 0, %v896
        %v898 = vrot.slane %v893, %v897
        %v900 = vadd.f32 %v885, %v898
        %v901 = vadd.f32 %v886, %v898
        %v902 = vadd.f32 %v887, %v898
        %v903 = vadd.f32 %v888, %v898
        %v904 = vadd.f32 %v889, %v898
        %v905 = vadd.f32 %v890, %v898
        %v906 = vadd.f32 %v891, %v898
        %v907 = vadd.f32 %v892, %v898
        %908 = vst [vmem:[#allocation2] sm:$0xff] %v900
        %909 = vst [vmem:[#allocation2 + $0x8] sm:$0xff] %v901
        %910 = vst [vmem:[#allocation2 + $0x10] sm:$0xff] %v902
        %911 = vst [vmem:[#allocation2 + $0x18] sm:$0xff] %v903
        %912 = vst [vmem:[#allocation2 + $0x20] sm:$0xff] %v904
        %913 = vst [vmem:[#allocation2 + $0x28] sm:$0xff] %v905
        %914 = vst [vmem:[#allocation2 + $0x30] sm:$0xff] %v906
        %915 = vst [vmem:[#allocation2 + $0x38] sm:$0xff] %v907
        %p916 = scmp.eq.s32.totalorder %s35, 2
        // Predicated region
        $region69: #{tpu_custom_call.1} parent=47 // pred_check
          %p917 = pneg %p916
        $region70: #{tpu_custom_call.1} parent=47 // pred_check_branch
          %919 = sbr.rel (%p917) target = $region72
        $region71: #{tpu_custom_call.1} parent=47 // pred_region
          %920 = vst [vmem:[%s452] sm:$0xff] %v900
          %921 = vst [vmem:[%s452 + $0x8] sm:$0xff] %v901
          %922 = vst [vmem:[%s452 + $0x10] sm:$0xff] %v902
          %923 = vst [vmem:[%s452 + $0x18] sm:$0xff] %v903
          %924 = vst [vmem:[%s452 + $0x20] sm:$0xff] %v904
          %925 = vst [vmem:[%s452 + $0x28] sm:$0xff] %v905
          %926 = vst [vmem:[%s452 + $0x30] sm:$0xff] %v906
          %927 = vst [vmem:[%s452 + $0x38] sm:$0xff] %v907
        $region72: #{tpu_custom_call.1} parent=47 // pred_fallthru
          _
        %s928 = sand.u32 %s232, 1
        %s929 = scalar_lea.sflag [#allocation5], %s928
        %s930 = sand.u32 %s232, 1
        %s931 = smul.addr %s930, 64
        %s932 = scalar_lea.vmem [#allocation11], %s931
        // Predicated region
        $region73: #{tpu_custom_call.1} parent=47 // pred_check
          %p933 = pneg %p242
        $region74: #{tpu_custom_call.1} parent=47 // pred_check_branch
          %935 = sbr.rel (%p933) target = $region76
        $region75: #{tpu_custom_call.1} parent=47 // pred_region
          %s936 = smul.u32 8, %s34
          %s938 = ssub.s32 1024, 1024
          %939 = vsyncadd %s929, %s938
          %s940 = smul.addr %s936, 128
          %s941 = scalar_lea.hbm %s7, %s940
          %s942 = sshll.u32 %s932, 4
          %s943 = int_to_ptr.vmem [resolvable:$true] %s942
          %948 = dma.vmem_to_hbm [thread:$0]  %s943, 1024, %s941, %s929, 128, 128, 8
        $region76: #{tpu_custom_call.1} parent=47 // pred_fallthru
          _
      $region48: #{tpu_custom_call.1} parent=5 // pred_fallthru
        _
      %p949 = scmp.le.s32.totalorder 2, %s25
      // Predicated region
      $region77: #{tpu_custom_call.1} parent=5 // pred_check
        %p950 = pneg %p949
      $region78: #{tpu_custom_call.1} parent=5 // pred_check_branch
        %952 = sbr.rel (%p950) target = $region80
      $region79: #{tpu_custom_call.1} parent=5 // pred_region
        %s953 = ssub.s32 %s25, 2
        // Predicated region
        $region81: #{tpu_custom_call.1} parent=79 // pred_check
          %p954 = pneg %p248
        $region82: #{tpu_custom_call.1} parent=79 // pred_check_branch
          %956 = sbr.rel (%p954) target = $region84
        $region83: #{tpu_custom_call.1} parent=79 // pred_region
          %s957 = sand.u32 %s233, 1
          %s958 = scalar_lea.sflag [#allocation5], %s957
          %s959 = sand.u32 %s233, 1
          %s960 = smul.addr %s959, 64
          %s961 = scalar_lea.vmem [#allocation11], %s960
          %962 = dma.done %s958, 1024
        $region84: #{tpu_custom_call.1} parent=79 // pred_fallthru
          _
      $region80: #{tpu_custom_call.1} parent=5 // pred_fallthru
        _
    $region6: #{tpu_custom_call.1} parent=1 // loop_footer
      %s29 = sadd.s32 1, %s25
    $region7: #{tpu_custom_call.1} parent=1 // loop_footer_branch
      %24 = sbr.rel target = $region3
    $region8: #{tpu_custom_call.1} parent=1 // loop_exit
      _
    %963 = vsyncpa [#allocation4], 1
    %s964 = scalar_lea.sflag [#allocation4], 1
    %965 = vsyncpa %s964, 1
    %966 = vsyncpa [#allocation7], 1
    %s967 = scalar_lea.sflag [#allocation7], 1
    %968 = vsyncpa %s967, 1
    %969 = vsyncpa [#allocation10], 1
    %s970 = scalar_lea.sflag [#allocation10], 1
    %971 = vsyncpa %s970, 1
    %972 = vsyncpa [#allocation5], 1
    %s973 = scalar_lea.sflag [#allocation5], 1
    %974 = vsyncpa %s973, 1

</llo_original>
